<compile_context>
chip_gen: v7x
topology: tpu7x:2x2x1
jax: 0.10.0
libtpu: 0.0.40
codegen_flags: <defaults>
</compile_context>

<pallas_src>
import functools

import jax
import jax.numpy as jnp
from jax.experimental import pallas as pl
from jax.experimental.pallas import tpu as pltpu

IN_CH = 1          # in_channel_num (default of the PyTorch module)
CH = 8             # channels
REDUCED = 16       # reduced_size
OUT = 32           # out_channels
NEG_SLOPE = 0.01   # torch.nn.LeakyReLU default

_PHASES = 4            # batch elems packed per output row: 4 * 32 = 128 lanes
_CHUNK_R = 128         # output rows per inner-loop chunk (= 512 batch elems)
_TILE_R_MAX = 8192     # output rows per grid step (4 MiB f32 output block)
_SLAB_COLS = 128

# ---------------------------------------------------------------------------
# Parameter slab layout: phase-expanded (4-way block-diagonal) weights packed
# into one (SLAB_ROWS, 128) f32 slab, sliced in-kernel with static offsets.
# ---------------------------------------------------------------------------
_SLAB_SPECS = (
    ("w0s", 2 * _PHASES * CH, _PHASES * IN_CH),     # [conv1_0 ; down_0]  (64, 4)
    ("b0s", 2 * _PHASES * CH, 1),
    ("w20", _PHASES * CH, _PHASES * CH),            # (32, 32)
    ("b20", _PHASES * CH, 1),
    ("w11", _PHASES * CH, _PHASES * CH),
    ("b11", _PHASES * CH, 1),
    ("w21", _PHASES * CH, _PHASES * CH),
    ("b21", _PHASES * CH, 1),
    ("w2s", 2 * _PHASES * REDUCED, _PHASES * CH),   # [conv1_2 ; down_2]  (128, 32)
    ("b2s", 2 * _PHASES * REDUCED, 1),
    ("w22", _PHASES * REDUCED, _PHASES * REDUCED),  # (64, 64)
    ("b22", _PHASES * REDUCED, 1),
    ("wlt", _PHASES * REDUCED, _PHASES * OUT),      # block_diag(wl.T) (64, 128)
    ("blr", 1, _PHASES * OUT),                      # final bias as a (1, 128) row
)
_SLAB_LAYOUT = {}
_row = 0
for _name, _nr, _nc in _SLAB_SPECS:
    _SLAB_LAYOUT[_name] = (_row, _nr, _nc)
    _row += _nr
_SLAB_ROWS = ((_row + 7) // 8) * 8


def _leaky(v):
    # LeakyReLU(0.01) == max(v, 0.01*v) for 0 < slope < 1: one VPU op fewer
    # than the where/select form.
    return jnp.maximum(v, NEG_SLOPE * v)


def _ilnet_kernel(x_ref, p_ref, o_ref):
    # x_ref : (4, TILE_R)        phase-split input: x_ref[j, r] = x[4r + j]
    # p_ref : (SLAB_ROWS, 128)   packed block-diagonal weights (constant)
    # o_ref : (TILE_R, 128)      row r = [out[4r,:], out[4r+1,:], out[4r+2,:], out[4r+3,:]]
    n_chunks = x_ref.shape[1] // _CHUNK_R

    def w(name):
        r, nr, nc = _SLAB_LAYOUT[name]
        return p_ref[r:r + nr, :nc]          # static slice of the VMEM slab ref

    def mm(name, a):
        return jnp.dot(w(name), a, preferred_element_type=jnp.float32)

    def chunk(ci, carry):
        r0 = pl.multiple_of(ci * _CHUNK_R, _CHUNK_R)
        xb = x_ref[:, pl.ds(r0, _CHUNK_R)]                   # (4, CHUNK)

        # CausalConvolutionBlock 0 : 1 -> 8  (conv1 and 1x1 downsample share xb)
        s0 = mm("w0s", xb) + w("b0s")                        # (64, CHUNK)
        h = _leaky(s0[:_PHASES * CH])
        h = _leaky(mm("w20", h) + w("b20"))
        x1 = h + s0[_PHASES * CH:]

        # CausalConvolutionBlock 1 : 8 -> 8  (identity residual)
        h = _leaky(mm("w11", x1) + w("b11"))
        h = _leaky(mm("w21", h) + w("b21"))
        x2 = h + x1

        # CausalConvolutionBlock 2 : 8 -> 16 (conv1 and downsample share x2)
        s2 = mm("w2s", x2) + w("b2s")                        # (128, CHUNK)
        h = _leaky(s2[:_PHASES * REDUCED])
        h = _leaky(mm("w22", h) + w("b22"))
        x3 = h + s2[_PHASES * REDUCED:]                      # (64, CHUNK)

        # AdaptiveMaxPool1d(1) over L=1 == identity; SqueezeChannels drops time.
        # Final Linear(16, 32), emitted directly in the (N, 32)-row-major
        # output layout:  y[r, 32j + c] = sum_k x3[16j + k, r] * wl[c, k] + bl[c]
        y = jnp.dot(x3.T, w("wlt"), preferred_element_type=jnp.float32) + w("blr")
        o_ref[pl.ds(r0, _CHUNK_R), :] = y.astype(o_ref.dtype)
        return carry

    jax.lax.fori_loop(0, n_chunks, chunk, 0)


# ---------------------------------------------------------------------------
# Tiling policy
# ---------------------------------------------------------------------------
def _round_up(a, m):
    return ((a + m - 1) // m) * m


def _num_tensorcores():
    """Best-effort TensorCore count (for megacore-aware grid splitting)."""
    try:
        dev = jax.devices()[0]
        nc = getattr(dev, "num_cores", None)
        if nc:
            return max(1, int(nc))
        kind = str(getattr(dev, "device_kind", "")).lower()
        if "7" in kind:            # v7x-class chips: 2 TensorCores per chip
            return 2
    except Exception:
        pass
    return 1


def _pick_tile_r(r_rows):
    """Output rows (128 lanes = 4 batch elems each) per grid step."""
    r_pad = _round_up(max(r_rows, _CHUNK_R), _CHUNK_R)
    tile = min(r_pad, _TILE_R_MAX)
    ncores = _num_tensorcores()
    if ncores > 1 and r_pad >= 2048:
        # Multi-TC chips: keep the grid-step count a multiple of the core
        # count so the "parallel" axis shards evenly; each step still keeps
        # >= ~1K rows so the 0.35us per-step overhead stays amortized.
        steps = -(-r_pad // tile)
        steps = _round_up(max(steps, ncores), ncores)
        tile = min(tile, _round_up(-(-r_pad // steps), _CHUNK_R))
    return tile


# ---------------------------------------------------------------------------
# Parameter packing (runs ONCE, outside the jitted forward)
# ---------------------------------------------------------------------------
def _expand_block_diag(w):
    """(co, ci) -> (4co, 4ci): one independent copy per batch phase."""
    co, ci = w.shape
    e = jnp.zeros((_PHASES * co, _PHASES * ci), jnp.float32)
    for j in range(_PHASES):
        e = e.at[j * co:(j + 1) * co, j * ci:(j + 1) * ci].set(w)
    return e


def _expand_bias(b):
    return jnp.tile(jnp.asarray(b, jnp.float32).reshape(-1), (_PHASES,))


def pack_params(params):
    """Pack phase-expanded weights/biases into one (SLAB_ROWS, 128) f32 slab."""
    p = {k: jnp.asarray(v, jnp.float32) for k, v in params.items()}
    vals = {
        "w0s": jnp.concatenate(
            [_expand_block_diag(p["w10"]), _expand_block_diag(p["wd0"])], axis=0),
        "b0s": jnp.concatenate(
            [_expand_bias(p["b10"]), _expand_bias(p["bd0"])])[:, None],
        "w20": _expand_block_diag(p["w20"]), "b20": _expand_bias(p["b20"])[:, None],
        "w11": _expand_block_diag(p["w11"]), "b11": _expand_bias(p["b11"])[:, None],
        "w21": _expand_block_diag(p["w21"]), "b21": _expand_bias(p["b21"])[:, None],
        "w2s": jnp.concatenate(
            [_expand_block_diag(p["w12"]), _expand_block_diag(p["wd2"])], axis=0),
        "b2s": jnp.concatenate(
            [_expand_bias(p["b12"]), _expand_bias(p["bd2"])])[:, None],
        "w22": _expand_block_diag(p["w22"]), "b22": _expand_bias(p["b22"])[:, None],
        "wlt": _expand_block_diag(p["wl"].T),          # (16,32) -> (64,128)
        "blr": _expand_bias(p["bl"])[None, :],         # (1, 128)
    }
    slab = jnp.zeros((_SLAB_ROWS, _SLAB_COLS), jnp.float32)
    for name, (row, nr, nc) in _SLAB_LAYOUT.items():
        slab = slab.at[row:row + nr, :nc].set(vals[name])
    return slab


def init_ilnet_params(key):
    """Deterministic synthetic parameters matching ILNet(in_channel_num=1).

    Conv1d weights are (out, in, k); only the last tap contributes when L=1,
    so the effective (out, in) matrices are materialized directly.
    """
    ks = iter(jax.random.split(key, 18))

    def conv_last_tap(out_c, in_c, k=3):
        w_full = jax.random.normal(next(ks), (out_c, in_c, k), jnp.float32) * 0.2
        return w_full[:, :, k - 1]

    def bias(out_c):
        return jax.random.normal(next(ks), (out_c,), jnp.float32) * 0.05

    p = {}
    p["w10"], p["b10"] = conv_last_tap(CH, IN_CH), bias(CH)
    p["w20"], p["b20"] = conv_last_tap(CH, CH), bias(CH)
    p["wd0"], p["bd0"] = conv_last_tap(CH, IN_CH, k=1), bias(CH)
    p["w11"], p["b11"] = conv_last_tap(CH, CH), bias(CH)
    p["w21"], p["b21"] = conv_last_tap(CH, CH), bias(CH)
    p["w12"], p["b12"] = conv_last_tap(REDUCED, CH), bias(REDUCED)
    p["w22"], p["b22"] = conv_last_tap(REDUCED, REDUCED), bias(REDUCED)
    p["wd2"], p["bd2"] = conv_last_tap(REDUCED, CH, k=1), bias(REDUCED)
    p["wl"] = jax.random.normal(next(ks), (OUT, REDUCED), jnp.float32) * 0.2
    p["bl"] = bias(OUT)
    return p


# ---------------------------------------------------------------------------
# Forward
# ---------------------------------------------------------------------------
@functools.partial(jax.jit, static_argnames=("out_dtype",))
def ilnet_forward(x, slab, out_dtype=jnp.float32):
    """Equivalent of ILNet(in_channel_num=1).forward(x). Returns (N, 32)."""
    # PyTorch: x.reshape(-1, 1, 1)
    x_flat = x.reshape(-1).astype(jnp.float32)
    n = x_flat.shape[0]
    r_rows = -(-n // _PHASES)
    tile_r = _pick_tile_r(r_rows)
    r_total = _round_up(max(r_rows, 1), tile_r)
    n_pad = r_total * _PHASES
    if n_pad != n:
        x_flat = jnp.pad(x_flat, (0, n_pad - n))
    # Phase-split the cheap 1-channel input (4 B/elem) so the expensive output
    # (128 B/elem) is produced lane-dense and already in (N, 32) row-major.
    x4 = x_flat.reshape(r_total, _PHASES).T                      # (4, r_total)

    out2 = pl.pallas_call(
        _ilnet_kernel,
        out_shape=jax.ShapeDtypeStruct((r_total, _PHASES * OUT), out_dtype),
        grid_spec=pltpu.PrefetchScalarGridSpec(
            num_scalar_prefetch=0,
            grid=(r_total // tile_r,),
            in_specs=[
                pl.BlockSpec((_PHASES, tile_r), lambda i: (0, i)),
                pl.BlockSpec((_SLAB_ROWS, _SLAB_COLS), lambda i: (0, 0)),
            ],
            out_specs=pl.BlockSpec((tile_r, _PHASES * OUT), lambda i: (i, 0)),
        ),
        compiler_params=pltpu.CompilerParams(
            dimension_semantics=("parallel",)),
    )(x4, slab)

    # (r_total, 128) row-major == (n_pad, 32) row-major: the reshape is free.
    out = out2.reshape(n_pad, OUT)
    return out if n_pad == n else out[:n]


def ilnet_reference(x, params):
    """Pure-JAX reference of the collapsed forward (for verification)."""
    xr = x.reshape(-1, IN_CH).astype(jnp.float32)

    def mm(a, wn, bn):
        return jnp.dot(a, params[wn].T,
                       precision=jax.lax.Precision.HIGHEST) + params[bn][None, :]

    h = _leaky(mm(xr, "w10", "b10"))
    h = _leaky(mm(h, "w20", "b20"))
    x1 = h + mm(xr, "wd0", "bd0")
    h = _leaky(mm(x1, "w11", "b11"))
    h = _leaky(mm(h, "w21", "b21"))
    x2 = h + x1
    h = _leaky(mm(x2, "w12", "b12"))
    h = _leaky(mm(h, "w22", "b22"))
    x3 = h + mm(x2, "wd2", "bd2")
    return mm(x3, "wl", "bl")


if __name__ == "__main__":
    key = jax.random.PRNGKey(0)
    k_x, k_p = jax.random.split(key)

    # ILNet.forward flattens its input to (-1, 1, 1); any input shape works.
    x = jax.random.normal(k_x, (2, 4, 16, 16), jnp.float32)      # N = 2048 rows
    params = init_ilnet_params(k_p)
    slab = jax.block_until_ready(pack_params(params))            # packed once, outside jit

    out = jax.block_until_ready(ilnet_forward(x, slab))
    ref = ilnet_reference(x, params)

    assert out.shape == (x.size // IN_CH, OUT), out.shape
    err = float(jnp.max(jnp.abs(out - ref)))
    assert jnp.allclose(out, ref, atol=5e-4, rtol=5e-4), err

    print("KERNEL_OK")
</pallas_src>

<mosaic_0001>
module attributes {stable_mosaic.version = 11 : i64} {
  func.func @_ilnet_kernel(%arg0: i32, %arg1: memref<4x512xf32, #tpu.memory_space<vmem>>, %arg2: memref<776x128xf32, #tpu.memory_space<vmem>>, %arg3: memref<512x128xf32, #tpu.memory_space<vmem>>) attributes {dimension_semantics = [#tpu.dimension_semantics<parallel>], iteration_bounds = array<i64: 1>, scalar_prefetch = 0 : i64, scratch_operands = 0 : i64, tpu.core_type = #tpu.core_type<tc>, window_params = [{transform_indices = @transform_0, window_bounds = array<i64: 4, 512>}, {pipeline_mode = #tpu.pipeline_mode<synchronous>, transform_indices = @transform_1, window_bounds = array<i64: 776, 128>}, {transform_indices = @transform_2, window_bounds = array<i64: 512, 128>}]} {
    %c0_i32 = arith.constant 0 : i32
    %c4_i32 = arith.constant 4 : i32
    %0 = arith.addi %c0_i32, %c4_i32 : i32
    %c1_i32 = arith.constant 1 : i32
    scf.for %arg4 = %c0_i32 to %0 step %c1_i32  : i32 {
      %c128_i32 = arith.constant 128 : i32
      %1 = arith.muli %arg4, %c128_i32 : i32
      %2 = tpu.assume_multiple %1, 128 : i32
      %c0 = arith.constant 0 : index
      %3 = arith.index_cast %2 : i32 to index
      %4 = vector.load %arg1[%c0, %3] : memref<4x512xf32, #tpu.memory_space<vmem>>, vector<4x128xf32>
      %c0_1 = arith.constant 0 : index
      %c0_2 = arith.constant 0 : index
      %5 = vector.load %arg2[%c0_1, %c0_2] : memref<776x128xf32, #tpu.memory_space<vmem>>, vector<64x4xf32>
      %cst = arith.constant dense<0.000000e+00> : vector<64x128xf32>
      %6 = tpu.matmul %5, %4, %cst {dimension_numbers = #tpu.dot_dimension_numbers<[1], [0], [0], [1], [0, 0, 1, 1], [], []>} : vector<64x4xf32>, vector<4x128xf32>, vector<64x128xf32> -> vector<64x128xf32>
      %c64 = arith.constant 64 : index
      %c0_3 = arith.constant 0 : index
      %7 = vector.load %arg2[%c64, %c0_3] : memref<776x128xf32, #tpu.memory_space<vmem>>, vector<64x1xf32>
      %8 = vector.broadcast %7 : vector<64x1xf32> to vector<64x128xf32>
      %9 = arith.addf %6, %8 : vector<64x128xf32>
      %10 = vector.extract_strided_slice %9 {offsets = [0, 0], sizes = [32, 128], strides = [1, 1]} : vector<64x128xf32> to vector<32x128xf32>
      %cst_4 = arith.constant 0.00999999977 : f32
      %11 = vector.broadcast %cst_4 : f32 to vector<32x128xf32>
      %12 = arith.mulf %11, %10 : vector<32x128xf32>
      %13 = arith.maximumf %10, %12 : vector<32x128xf32>
      %c128 = arith.constant 128 : index
      %c0_5 = arith.constant 0 : index
      %14 = vector.load %arg2[%c128, %c0_5] : memref<776x128xf32, #tpu.memory_space<vmem>>, vector<32x32xf32>
      %cst_6 = arith.constant dense<0.000000e+00> : vector<32x128xf32>
      %15 = tpu.matmul %14, %13, %cst_6 {dimension_numbers = #tpu.dot_dimension_numbers<[1], [0], [0], [1], [0, 0, 1, 1], [], []>} : vector<32x32xf32>, vector<32x128xf32>, vector<32x128xf32> -> vector<32x128xf32>
      %c160 = arith.constant 160 : index
      %c0_7 = arith.constant 0 : index
      %16 = vector.load %arg2[%c160, %c0_7] : memref<776x128xf32, #tpu.memory_space<vmem>>, vector<32x1xf32>
      %17 = vector.broadcast %16 : vector<32x1xf32> to vector<32x128xf32>
      %18 = arith.addf %15, %17 : vector<32x128xf32>
      %cst_8 = arith.constant 0.00999999977 : f32
      %19 = vector.broadcast %cst_8 : f32 to vector<32x128xf32>
      %20 = arith.mulf %19, %18 : vector<32x128xf32>
      %21 = arith.maximumf %18, %20 : vector<32x128xf32>
      %22 = vector.extract_strided_slice %9 {offsets = [32, 0], sizes = [32, 128], strides = [1, 1]} : vector<64x128xf32> to vector<32x128xf32>
      %23 = arith.addf %21, %22 : vector<32x128xf32>
      %c192 = arith.constant 192 : index
      %c0_9 = arith.constant 0 : index
      %24 = vector.load %arg2[%c192, %c0_9] : memref<776x128xf32, #tpu.memory_space<vmem>>, vector<32x32xf32>
      %cst_10 = arith.constant dense<0.000000e+00> : vector<32x128xf32>
      %25 = tpu.matmul %24, %23, %cst_10 {dimension_numbers = #tpu.dot_dimension_numbers<[1], [0], [0], [1], [0, 0, 1, 1], [], []>} : vector<32x32xf32>, vector<32x128xf32>, vector<32x128xf32> -> vector<32x128xf32>
      %c224 = arith.constant 224 : index
      %c0_11 = arith.constant 0 : index
      %26 = vector.load %arg2[%c224, %c0_11] : memref<776x128xf32, #tpu.memory_space<vmem>>, vector<32x1xf32>
      %27 = vector.broadcast %26 : vector<32x1xf32> to vector<32x128xf32>
      %28 = arith.addf %25, %27 : vector<32x128xf32>
      %cst_12 = arith.constant 0.00999999977 : f32
      %29 = vector.broadcast %cst_12 : f32 to vector<32x128xf32>
      %30 = arith.mulf %29, %28 : vector<32x128xf32>
      %31 = arith.maximumf %28, %30 : vector<32x128xf32>
      %c256 = arith.constant 256 : index
      %c0_13 = arith.constant 0 : index
      %32 = vector.load %arg2[%c256, %c0_13] : memref<776x128xf32, #tpu.memory_space<vmem>>, vector<32x32xf32>
      %cst_14 = arith.constant dense<0.000000e+00> : vector<32x128xf32>
      %33 = tpu.matmul %32, %31, %cst_14 {dimension_numbers = #tpu.dot_dimension_numbers<[1], [0], [0], [1], [0, 0, 1, 1], [], []>} : vector<32x32xf32>, vector<32x128xf32>, vector<32x128xf32> -> vector<32x128xf32>
      %c288 = arith.constant 288 : index
      %c0_15 = arith.constant 0 : index
      %34 = vector.load %arg2[%c288, %c0_15] : memref<776x128xf32, #tpu.memory_space<vmem>>, vector<32x1xf32>
      %35 = vector.broadcast %34 : vector<32x1xf32> to vector<32x128xf32>
      %36 = arith.addf %33, %35 : vector<32x128xf32>
      %cst_16 = arith.constant 0.00999999977 : f32
      %37 = vector.broadcast %cst_16 : f32 to vector<32x128xf32>
      %38 = arith.mulf %37, %36 : vector<32x128xf32>
      %39 = arith.maximumf %36, %38 : vector<32x128xf32>
      %40 = arith.addf %39, %23 : vector<32x128xf32>
      %c320 = arith.constant 320 : index
      %c0_17 = arith.constant 0 : index
      %41 = vector.load %arg2[%c320, %c0_17] : memref<776x128xf32, #tpu.memory_space<vmem>>, vector<128x32xf32>
      %cst_18 = arith.constant dense<0.000000e+00> : vector<128x128xf32>
      %42 = tpu.matmul %41, %40, %cst_18 {dimension_numbers = #tpu.dot_dimension_numbers<[1], [0], [0], [1], [0, 0, 1, 1], [], []>} : vector<128x32xf32>, vector<32x128xf32>, vector<128x128xf32> -> vector<128x128xf32>
      %c448 = arith.constant 448 : index
      %c0_19 = arith.constant 0 : index
      %43 = vector.load %arg2[%c448, %c0_19] : memref<776x128xf32, #tpu.memory_space<vmem>>, vector<128x1xf32>
      %44 = vector.broadcast %43 : vector<128x1xf32> to vector<128x128xf32>
      %45 = arith.addf %42, %44 : vector<128x128xf32>
      %46 = vector.extract_strided_slice %45 {offsets = [0, 0], sizes = [64, 128], strides = [1, 1]} : vector<128x128xf32> to vector<64x128xf32>
      %cst_20 = arith.constant 0.00999999977 : f32
      %47 = vector.broadcast %cst_20 : f32 to vector<64x128xf32>
      %48 = arith.mulf %47, %46 : vector<64x128xf32>
      %49 = arith.maximumf %46, %48 : vector<64x128xf32>
      %c576 = arith.constant 576 : index
      %c0_21 = arith.constant 0 : index
      %50 = vector.load %arg2[%c576, %c0_21] : memref<776x128xf32, #tpu.memory_space<vmem>>, vector<64x64xf32>
      %cst_22 = arith.constant dense<0.000000e+00> : vector<64x128xf32>
      %51 = tpu.matmul %50, %49, %cst_22 {dimension_numbers = #tpu.dot_dimension_numbers<[1], [0], [0], [1], [0, 0, 1, 1], [], []>} : vector<64x64xf32>, vector<64x128xf32>, vector<64x128xf32> -> vector<64x128xf32>
      %c640 = arith.constant 640 : index
      %c0_23 = arith.constant 0 : index
      %52 = vector.load %arg2[%c640, %c0_23] : memref<776x128xf32, #tpu.memory_space<vmem>>, vector<64x1xf32>
      %53 = vector.broadcast %52 : vector<64x1xf32> to vector<64x128xf32>
      %54 = arith.addf %51, %53 : vector<64x128xf32>
      %cst_24 = arith.constant 0.00999999977 : f32
      %55 = vector.broadcast %cst_24 : f32 to vector<64x128xf32>
      %56 = arith.mulf %55, %54 : vector<64x128xf32>
      %57 = arith.maximumf %54, %56 : vector<64x128xf32>
      %58 = vector.extract_strided_slice %45 {offsets = [64, 0], sizes = [64, 128], strides = [1, 1]} : vector<128x128xf32> to vector<64x128xf32>
      %59 = arith.addf %57, %58 : vector<64x128xf32>
      %60 = tpu.transpose %59, [1, 0] : vector<64x128xf32> -> vector<128x64xf32>
      %c704 = arith.constant 704 : index
      %c0_25 = arith.constant 0 : index
      %61 = vector.load %arg2[%c704, %c0_25] : memref<776x128xf32, #tpu.memory_space<vmem>>, vector<64x128xf32>
      %cst_26 = arith.constant dense<0.000000e+00> : vector<128x128xf32>
      %62 = tpu.matmul %60, %61, %cst_26 {dimension_numbers = #tpu.dot_dimension_numbers<[1], [0], [0], [1], [0, 0, 1, 1], [], []>} : vector<128x64xf32>, vector<64x128xf32>, vector<128x128xf32> -> vector<128x128xf32>
      %c768 = arith.constant 768 : index
      %c0_27 = arith.constant 0 : index
      %63 = vector.load %arg2[%c768, %c0_27] : memref<776x128xf32, #tpu.memory_space<vmem>>, vector<1x128xf32>
      %64 = vector.broadcast %63 : vector<1x128xf32> to vector<128x128xf32>
      %65 = arith.addf %62, %64 : vector<128x128xf32>
      %66 = arith.index_cast %2 : i32 to index
      %c0_28 = arith.constant 0 : index
      %67 = vector.load %arg3[%66, %c0_28] : memref<512x128xf32, #tpu.memory_space<vmem>>, vector<128x128xf32>
      tpu.vector_store %arg3[%66, %c0_28], %65 {strides = array<i32>} : memref<512x128xf32, #tpu.memory_space<vmem>>, vector<128x128xf32>,
    }
    %c4_i32_0 = arith.constant 4 : i32
    return
  }
  func.func @transform_0(%arg0: i32) -> (i32, i32) {
    %c0_i32 = arith.constant 0 : i32
    %c0_i32_0 = arith.constant 0 : i32
    return %c0_i32, %arg0 : i32, i32
  }
  func.func @transform_1(%arg0: i32) -> (i32, i32) {
    %c0_i32 = arith.constant 0 : i32
    %c0_i32_0 = arith.constant 0 : i32
    %c0_i32_1 = arith.constant 0 : i32
    return %c0_i32, %c0_i32_0 : i32, i32
  }
  func.func @transform_2(%arg0: i32) -> (i32, i32) {
    %c0_i32 = arith.constant 0 : i32
    %c0_i32_0 = arith.constant 0 : i32
    return %arg0, %c0_i32 : i32, i32
  }
}

</mosaic_0001>

<llo_original>
// kernel: ilnet_forward.1
$region0: #{ilnet_forward.1}
  #allocation0 [shape = 'u32[]', space=smem, size = 0x4, offset = 0x4, fixed_abs, tag = 'smem constant byte address 0x4 - core index']
  #allocation1 [shape = 'u32[144,128]{1,0:T(1,128)}', space=vmem, size = 0x12000, scoped, tag = 'internal scratch']
  %s0 = inlined_call_operand.vmem [shape: f32[4,512], index: 0, kind: input, shape index: {}]
  %s1 = inlined_call_operand.vmem [shape: f32[776,128], index: 1, kind: input, shape index: {}]
  %s2 = inlined_call_operand.vmem [shape: f32[512,128], index: 2, kind: output, shape index: {}]
  %s3 = sld [smem:[#allocation0]]
  $region25: #{ilnet_forward.1} parent=0
    _
  %s5 = ssub.s32 1, %s3
  %s6 = scalar_select 0, %s5, %s3
  // Predicated region
  $region2: #{ilnet_forward.1} parent=0 // pred_check
    _
  $region3: #{ilnet_forward.1} parent=0 // pred_check_branch
    %8 = sbr.rel (0) target = $region5
  $region4: #{ilnet_forward.1} parent=0 // pred_region
    _
  $region5: #{ilnet_forward.1} parent=0 // pred_fallthru
    _
  // Predicated region
  $region6: #{ilnet_forward.1} parent=0 // pred_check
    _
  $region7: #{ilnet_forward.1} parent=0 // pred_check_branch
    %10 = sbr.rel (0) target = $region9
  $region8: #{ilnet_forward.1} parent=0 // pred_region
    _
  $region9: #{ilnet_forward.1} parent=0 // pred_fallthru
    _
  loop: start=0, step=1, limit=4
  $region10: #{ilnet_forward.1} parent=0 // loop_pre_header
    _
  $region11: #{ilnet_forward.1} parent=0 // loop_header
    %s12 = sphi 0, %s16
    %p13 = scmp.ge.s32.totalorder %s12, 4
  $region12: #{ilnet_forward.1} parent=0 // loop_header_branch
    %15 = sbr.rel (%p13) target = $region16
  $region13: #{ilnet_forward.1} parent=0 // loop_body
    %s17 = smul.u32 %s12, 128
    %s18 = sshra.s32 %s17, 7
    %s19 = sand.u32 %s17, 127
    %s20 = smul.addr %s18, 4
    %s21 = scalar_lea.vmem %s0, %s20
    %v22 = vld [vmem:[%s21] sm:$0xf]
    %v23 = vld [vmem:[%s1] sm:$0xff]
    %v24 = vld [vmem:[%s1 + $0x8] sm:$0xff]
    %v25 = vld [vmem:[%s1 + $0x10] sm:$0xff]
    %v26 = vld [vmem:[%s1 + $0x18] sm:$0xff]
    %v27 = vld [vmem:[%s1 + $0x20] sm:$0xff]
    %v28 = vld [vmem:[%s1 + $0x28] sm:$0xff]
    %v29 = vld [vmem:[%s1 + $0x30] sm:$0xff]
    %v30 = vld [vmem:[%s1 + $0x38] sm:$0xff]
    %v31 = vld [vmem:[%s1 + $0x40] sm:$0xff]
    %v32 = vld [vmem:[%s1 + $0x48] sm:$0xff]
    %v33 = vld [vmem:[%s1 + $0x50] sm:$0xff]
    %v34 = vld [vmem:[%s1 + $0x58] sm:$0xff]
    %v35 = vld [vmem:[%s1 + $0x60] sm:$0xff]
    %v36 = vld [vmem:[%s1 + $0x68] sm:$0xff]
    %v37 = vld [vmem:[%s1 + $0x70] sm:$0xff]
    %v38 = vld [vmem:[%s1 + $0x78] sm:$0xff]
    %40 = vset.pattern.permute.xlu0 0
    %41 = vperm.xlu0 %40, %v31
    %v42 = vpop.permute.xlu0 %41
    %45 = vset.pattern.permute.xlu0 0
    %46 = vperm.xlu0 %45, %v32
    %v47 = vpop.permute.xlu0 %46
    %50 = vset.pattern.permute.xlu0 0
    %51 = vperm.xlu0 %50, %v33
    %v52 = vpop.permute.xlu0 %51
    %55 = vset.pattern.permute.xlu0 0
    %56 = vperm.xlu0 %55, %v34
    %v57 = vpop.permute.xlu0 %56
    %60 = vset.pattern.permute.xlu0 0
    %61 = vperm.xlu0 %60, %v35
    %v62 = vpop.permute.xlu0 %61
    %65 = vset.pattern.permute.xlu0 0
    %66 = vperm.xlu0 %65, %v36
    %v67 = vpop.permute.xlu0 %66
    %70 = vset.pattern.permute.xlu0 0
    %71 = vperm.xlu0 %70, %v37
    %v72 = vpop.permute.xlu0 %71
    %75 = vset.pattern.permute.xlu0 0
    %76 = vperm.xlu0 %75, %v38
    %v77 = vpop.permute.xlu0 %76
    %vm79 = vcmask 31744
    %v81 = vsel %vm79, %v23, 0
    %v84 = vsel %vm79, %v24, 0
    %v87 = vsel %vm79, %v25, 0
    %v90 = vsel %vm79, %v26, 0
    %v93 = vsel %vm79, %v27, 0
    %v96 = vsel %vm79, %v28, 0
    %v99 = vsel %vm79, %v29, 0
    %v102 = vsel %vm79, %v30, 0
    %vm104 = vcmask 1043456
    %v106 = vsel %vm104, %v22, 0
    %108 = vmatprep.subr.mxu0 0.0
    %109 = vmatpush1.msra.mxu0 %v106
    %110 = vmatprep.subr.mxu0 0.0
    %111 = vmatpush1.msra.mxu0 0.0
    %112 = vmatprep.subr.mxu0 0.0
    %113 = vmatpush1.msra.mxu0 0.0
    %114 = vmatprep.subr.mxu0 0.0
    %115 = vmatpush1.msra.mxu0 0.0
    %116 = vmatprep.subr.mxu0 0.0
    %117 = vmatpush1.msra.mxu0 0.0
    %118 = vmatprep.subr.mxu0 0.0
    %119 = vmatpush1.msra.mxu0 0.0
    %120 = vmatprep.subr.mxu0 0.0
    %121 = vmatpush1.msra.mxu0 0.0
    %122 = vmatprep.subr.mxu0 0.0
    %123 = vmatpush1.msra.mxu0 0.0
    %124 = vmatprep.subr.mxu0 0.0
    %125 = vmatpush1.msra.mxu0 0.0
    %126 = vmatprep.subr.mxu0 0.0
    %127 = vmatpush1.msra.mxu0 0.0
    %128 = vmatprep.subr.mxu0 0.0
    %129 = vmatpush1.msra.mxu0 0.0
    %130 = vmatprep.subr.mxu0 0.0
    %131 = vmatpush1.msra.mxu0 0.0
    %132 = vmatprep.subr.mxu0 0.0
    %133 = vmatpush1.msra.mxu0 0.0
    %134 = vmatprep.subr.mxu0 0.0
    %135 = vmatpush1.msra.mxu0 0.0
    %136 = vmatprep.subr.mxu0 0.0
    %137 = vmatpush1.msra.mxu0 0.0
    %138 = vmatprep.subr.mxu0 0.0
    %139 = vmatpush1.msra.mxu0 0.0
    %140 = vmatprep.subr.mxu0 0.0
    %141 = vmatpush1.msra.mxu0 0.0
    %142 = vmatprep.subr.mxu0 0.0
    %143 = vmatpush1.msra.mxu0 0.0
    %144 = vmatprep.subr.mxu0 0.0
    %145 = vmatpush1.msra.mxu0 0.0
    %146 = vmatprep.subr.mxu0 0.0
    %147 = vmatpush1.msra.mxu0 0.0
    %148 = vmatprep.subr.mxu0 0.0
    %149 = vmatpush1.msra.mxu0 0.0
    %150 = vmatprep.subr.mxu0 0.0
    %151 = vmatpush1.msra.mxu0 0.0
    %152 = vmatprep.subr.mxu0 0.0
    %153 = vmatpush1.msra.mxu0 0.0
    %154 = vmatprep.subr.mxu0 0.0
    %155 = vmatpush1.msra.mxu0 0.0
    %156 = vmatprep.subr.mxu0 0.0
    %157 = vmatpush1.msra.mxu0 0.0
    %158 = vmatprep.subr.mxu0 0.0
    %159 = vmatpush1.msra.mxu0 0.0
    %160 = vmatprep.subr.mxu0 0.0
    %161 = vmatpush1.msra.mxu0 0.0
    %162 = vmatprep.subr.mxu0 0.0
    %163 = vmatpush1.msra.mxu0 0.0
    %164 = vmatprep.subr.mxu0 0.0
    %165 = vmatpush1.msra.mxu0 0.0
    %166 = vmatprep.subr.mxu0 0.0
    %167 = vmatpush1.msra.mxu0 0.0
    %168 = vmatprep.subr.mxu0 0.0
    %169 = vmatpush1.msra.mxu0 0.0
    %170 = vmatprep.subr.mxu0 0.0
    %171 = vmatpush1.msra.mxu0 0.0
    %172 = vmatprep.mubr.f32.mxu0 0.0
    %173 = vmatmul.mubr.f32.gmra.mrb[0].mxu0 %v81
    %v174 = vpop.f32.mrb[0].mxu0
    %v175 = vadd.f32 %v42, %v174
    %v176 = vpop.f32.mrb[0].mxu0
    %177 = vmatprep.mubr.f32.mxu0 0.0
    %178 = vmatmul.mubr.f32.gmra.mrb[0].mxu0 %v84
    %v179 = vpop.f32.mrb[0].mxu0
    %v180 = vadd.f32 %v47, %v179
    %v181 = vpop.f32.mrb[0].mxu0
    %182 = vmatprep.mubr.f32.mxu0 0.0
    %183 = vmatmul.mubr.f32.gmra.mrb[0].mxu0 %v87
    %v184 = vpop.f32.mrb[0].mxu0
    %v185 = vadd.f32 %v52, %v184
    %v186 = vpop.f32.mrb[0].mxu0
    %187 = vmatprep.mubr.f32.mxu0 0.0
    %188 = vmatmul.mubr.f32.gmra.mrb[0].mxu0 %v90
    %v189 = vpop.f32.mrb[0].mxu0
    %v190 = vadd.f32 %v57, %v189
    %v191 = vpop.f32.mrb[0].mxu0
    %192 = vmatprep.mubr.f32.mxu0 0.0
    %193 = vmatmul.mubr.f32.gmra.mrb[0].mxu0 %v93
    %v194 = vpop.f32.mrb[0].mxu0
    %v195 = vadd.f32 %v62, %v194
    %v196 = vpop.f32.mrb[0].mxu0
    %197 = vmatprep.mubr.f32.mxu0 0.0
    %198 = vmatmul.mubr.f32.gmra.mrb[0].mxu0 %v96
    %v199 = vpop.f32.mrb[0].mxu0
    %v200 = vadd.f32 %v67, %v199
    %v201 = vpop.f32.mrb[0].mxu0
    %202 = vmatprep.mubr.f32.mxu0 0.0
    %203 = vmatmul.mubr.f32.gmra.mrb[0].mxu0 %v99
    %v204 = vpop.f32.mrb[0].mxu0
    %v205 = vadd.f32 %v72, %v204
    %v206 = vpop.f32.mrb[0].mxu0
    %207 = vmatprep.mubr.f32.mxu0 0.0
    %208 = vmatmul.mubr.f32.gmra.mrb[0].mxu0 %v102
    %v209 = vpop.f32.mrb[0].mxu0
    %v210 = vadd.f32 %v77, %v209
    %v211 = vpop.f32.mrb[0].mxu0
    %212 = vdwg.mxu0
    %v213 = vmul.f32 %v175, 0.01
    %v214 = vmul.f32 %v180, 0.01
    %v215 = vmul.f32 %v185, 0.01
    %v216 = vmul.f32 %v190, 0.01
    %v217 = vmax.f32 %v175, %v213
    %v218 = vmax.f32 %v180, %v214
    %v219 = vmax.f32 %v185, %v215
    %v220 = vmax.f32 %v190, %v216
    %v221 = vld [vmem:[%s1 + $0x80] sm:$0xff]
    %v222 = vld [vmem:[%s1 + $0x88] sm:$0xff]
    %v223 = vld [vmem:[%s1 + $0x90] sm:$0xff]
    %v224 = vld [vmem:[%s1 + $0x98] sm:$0xff]
    %v225 = vld [vmem:[%s1 + $0xa0] sm:$0xff]
    %v226 = vld [vmem:[%s1 + $0xa8] sm:$0xff]
    %v227 = vld [vmem:[%s1 + $0xb0] sm:$0xff]
    %v228 = vld [vmem:[%s1 + $0xb8] sm:$0xff]
    %230 = vset.pattern.permute.xlu0 0
    %231 = vperm.xlu0 %230, %v225
    %v232 = vpop.permute.xlu0 %231
    %235 = vset.pattern.permute.xlu0 0
    %236 = vperm.xlu0 %235, %v226
    %v237 = vpop.permute.xlu0 %236
    %240 = vset.pattern.permute.xlu0 0
    %241 = vperm.xlu0 %240, %v227
    %v242 = vpop.permute.xlu0 %241
    %245 = vset.pattern.permute.xlu0 0
    %246 = vperm.xlu0 %245, %v228
    %v247 = vpop.permute.xlu0 %246
    %vm249 = vcmask 261120
    %v251 = vsel %vm249, %v221, 0
    %v254 = vsel %vm249, %v222, 0
    %v257 = vsel %vm249, %v223, 0
    %v260 = vsel %vm249, %v224, 0
    %262 = vmatprep.subr.mxu0 0.0
    %263 = vmatpush1.msra.mxu0 %v217
    %264 = vmatprep.subr.mxu0 0.0
    %265 = vmatpush1.msra.mxu0 %v218
    %266 = vmatprep.subr.mxu0 0.0
    %267 = vmatpush1.msra.mxu0 %v219
    %268 = vmatprep.subr.mxu0 0.0
    %269 = vmatpush1.msra.mxu0 %v220
    %270 = vmatprep.subr.mxu0 0.0
    %271 = vmatpush1.msra.mxu0 0.0
    %272 = vmatprep.subr.mxu0 0.0
    %273 = vmatpush1.msra.mxu0 0.0
    %274 = vmatprep.subr.mxu0 0.0
    %275 = vmatpush1.msra.mxu0 0.0
    %276 = vmatprep.subr.mxu0 0.0
    %277 = vmatpush1.msra.mxu0 0.0
    %278 = vmatprep.subr.mxu0 0.0
    %279 = vmatpush1.msra.mxu0 0.0
    %280 = vmatprep.subr.mxu0 0.0
    %281 = vmatpush1.msra.mxu0 0.0
    %282 = vmatprep.subr.mxu0 0.0
    %283 = vmatpush1.msra.mxu0 0.0
    %284 = vmatprep.subr.mxu0 0.0
    %285 = vmatpush1.msra.mxu0 0.0
    %286 = vmatprep.subr.mxu0 0.0
    %287 = vmatpush1.msra.mxu0 0.0
    %288 = vmatprep.subr.mxu0 0.0
    %289 = vmatpush1.msra.mxu0 0.0
    %290 = vmatprep.subr.mxu0 0.0
    %291 = vmatpush1.msra.mxu0 0.0
    %292 = vmatprep.subr.mxu0 0.0
    %293 = vmatpush1.msra.mxu0 0.0
    %294 = vmatprep.subr.mxu0 0.0
    %295 = vmatpush1.msra.mxu0 0.0
    %296 = vmatprep.subr.mxu0 0.0
    %297 = vmatpush1.msra.mxu0 0.0
    %298 = vmatprep.subr.mxu0 0.0
    %299 = vmatpush1.msra.mxu0 0.0
    %300 = vmatprep.subr.mxu0 0.0
    %301 = vmatpush1.msra.mxu0 0.0
    %302 = vmatprep.subr.mxu0 0.0
    %303 = vmatpush1.msra.mxu0 0.0
    %304 = vmatprep.subr.mxu0 0.0
    %305 = vmatpush1.msra.mxu0 0.0
    %306 = vmatprep.subr.mxu0 0.0
    %307 = vmatpush1.msra.mxu0 0.0
    %308 = vmatprep.subr.mxu0 0.0
    %309 = vmatpush1.msra.mxu0 0.0
    %310 = vmatprep.subr.mxu0 0.0
    %311 = vmatpush1.msra.mxu0 0.0
    %312 = vmatprep.subr.mxu0 0.0
    %313 = vmatpush1.msra.mxu0 0.0
    %314 = vmatprep.subr.mxu0 0.0
    %315 = vmatpush1.msra.mxu0 0.0
    %316 = vmatprep.subr.mxu0 0.0
    %317 = vmatpush1.msra.mxu0 0.0
    %318 = vmatprep.subr.mxu0 0.0
    %319 = vmatpush1.msra.mxu0 0.0
    %320 = vmatprep.subr.mxu0 0.0
    %321 = vmatpush1.msra.mxu0 0.0
    %322 = vmatprep.subr.mxu0 0.0
    %323 = vmatpush1.msra.mxu0 0.0
    %324 = vmatprep.subr.mxu0 0.0
    %325 = vmatpush1.msra.mxu0 0.0
    %326 = vmatprep.mubr.f32.mxu0 0.0
    %327 = vmatmul.mubr.f32.gmra.mrb[0].mxu0 %v251
    %v328 = vpop.f32.mrb[0].mxu0
    %v329 = vadd.f32 %v232, %v328
    %v330 = vpop.f32.mrb[0].mxu0
    %331 = vmatprep.mubr.f32.mxu0 0.0
    %332 = vmatmul.mubr.f32.gmra.mrb[0].mxu0 %v254
    %v333 = vpop.f32.mrb[0].mxu0
    %v334 = vadd.f32 %v237, %v333
    %v335 = vpop.f32.mrb[0].mxu0
    %336 = vmatprep.mubr.f32.mxu0 0.0
    %337 = vmatmul.mubr.f32.gmra.mrb[0].mxu0 %v257
    %v338 = vpop.f32.mrb[0].mxu0
    %v339 = vadd.f32 %v242, %v338
    %v340 = vpop.f32.mrb[0].mxu0
    %341 = vmatprep.mubr.f32.mxu0 0.0
    %342 = vmatmul.mubr.f32.gmra.mrb[0].mxu0 %v260
    %v343 = vpop.f32.mrb[0].mxu0
    %v344 = vadd.f32 %v247, %v343
    %v345 = vpop.f32.mrb[0].mxu0
    %346 = vdwg.mxu0
    %v347 = vmul.f32 %v329, 0.01
    %v348 = vmul.f32 %v334, 0.01
    %v349 = vmul.f32 %v339, 0.01
    %v350 = vmul.f32 %v344, 0.01
    %v351 = vmax.f32 %v329, %v347
    %v352 = vmax.f32 %v334, %v348
    %v353 = vmax.f32 %v339, %v349
    %v354 = vmax.f32 %v344, %v350
    %v355 = vadd.f32 %v351, %v195
    %v356 = vadd.f32 %v352, %v200
    %v357 = vadd.f32 %v353, %v205
    %v358 = vadd.f32 %v354, %v210
    %v359 = vld [vmem:[%s1 + $0xc0] sm:$0xff]
    %v360 = vld [vmem:[%s1 + $0xc8] sm:$0xff]
    %v361 = vld [vmem:[%s1 + $0xd0] sm:$0xff]
    %v362 = vld [vmem:[%s1 + $0xd8] sm:$0xff]
    %v363 = vld [vmem:[%s1 + $0xe0] sm:$0xff]
    %v364 = vld [vmem:[%s1 + $0xe8] sm:$0xff]
    %v365 = vld [vmem:[%s1 + $0xf0] sm:$0xff]
    %v366 = vld [vmem:[%s1 + $0xf8] sm:$0xff]
    %368 = vset.pattern.permute.xlu0 0
    %369 = vperm.xlu0 %368, %v363
    %v370 = vpop.permute.xlu0 %369
    %373 = vset.pattern.permute.xlu0 0
    %374 = vperm.xlu0 %373, %v364
    %v375 = vpop.permute.xlu0 %374
    %378 = vset.pattern.permute.xlu0 0
    %379 = vperm.xlu0 %378, %v365
    %v380 = vpop.permute.xlu0 %379
    %383 = vset.pattern.permute.xlu0 0
    %384 = vperm.xlu0 %383, %v366
    %v385 = vpop.permute.xlu0 %384
    %v388 = vsel %vm249, %v359, 0
    %v391 = vsel %vm249, %v360, 0
    %v394 = vsel %vm249, %v361, 0
    %v397 = vsel %vm249, %v362, 0
    %399 = vmatprep.subr.mxu0 0.0
    %400 = vmatpush1.msra.mxu0 %v355
    %401 = vmatprep.subr.mxu0 0.0
    %402 = vmatpush1.msra.mxu0 %v356
    %403 = vmatprep.subr.mxu0 0.0
    %404 = vmatpush1.msra.mxu0 %v357
    %405 = vmatprep.subr.mxu0 0.0
    %406 = vmatpush1.msra.mxu0 %v358
    %407 = vmatprep.subr.mxu0 0.0
    %408 = vmatpush1.msra.mxu0 0.0
    %409 = vmatprep.subr.mxu0 0.0
    %410 = vmatpush1.msra.mxu0 0.0
    %411 = vmatprep.subr.mxu0 0.0
    %412 = vmatpush1.msra.mxu0 0.0
    %413 = vmatprep.subr.mxu0 0.0
    %414 = vmatpush1.msra.mxu0 0.0
    %415 = vmatprep.subr.mxu0 0.0
    %416 = vmatpush1.msra.mxu0 0.0
    %417 = vmatprep.subr.mxu0 0.0
    %418 = vmatpush1.msra.mxu0 0.0
    %419 = vmatprep.subr.mxu0 0.0
    %420 = vmatpush1.msra.mxu0 0.0
    %421 = vmatprep.subr.mxu0 0.0
    %422 = vmatpush1.msra.mxu0 0.0
    %423 = vmatprep.subr.mxu0 0.0
    %424 = vmatpush1.msra.mxu0 0.0
    %425 = vmatprep.subr.mxu0 0.0
    %426 = vmatpush1.msra.mxu0 0.0
    %427 = vmatprep.subr.mxu0 0.0
    %428 = vmatpush1.msra.mxu0 0.0
    %429 = vmatprep.subr.mxu0 0.0
    %430 = vmatpush1.msra.mxu0 0.0
    %431 = vmatprep.subr.mxu0 0.0
    %432 = vmatpush1.msra.mxu0 0.0
    %433 = vmatprep.subr.mxu0 0.0
    %434 = vmatpush1.msra.mxu0 0.0
    %435 = vmatprep.subr.mxu0 0.0
    %436 = vmatpush1.msra.mxu0 0.0
    %437 = vmatprep.subr.mxu0 0.0
    %438 = vmatpush1.msra.mxu0 0.0
    %439 = vmatprep.subr.mxu0 0.0
    %440 = vmatpush1.msra.mxu0 0.0
    %441 = vmatprep.subr.mxu0 0.0
    %442 = vmatpush1.msra.mxu0 0.0
    %443 = vmatprep.subr.mxu0 0.0
    %444 = vmatpush1.msra.mxu0 0.0
    %445 = vmatprep.subr.mxu0 0.0
    %446 = vmatpush1.msra.mxu0 0.0
    %447 = vmatprep.subr.mxu0 0.0
    %448 = vmatpush1.msra.mxu0 0.0
    %449 = vmatprep.subr.mxu0 0.0
    %450 = vmatpush1.msra.mxu0 0.0
    %451 = vmatprep.subr.mxu0 0.0
    %452 = vmatpush1.msra.mxu0 0.0
    %453 = vmatprep.subr.mxu0 0.0
    %454 = vmatpush1.msra.mxu0 0.0
    %455 = vmatprep.subr.mxu0 0.0
    %456 = vmatpush1.msra.mxu0 0.0
    %457 = vmatprep.subr.mxu0 0.0
    %458 = vmatpush1.msra.mxu0 0.0
    %459 = vmatprep.subr.mxu0 0.0
    %460 = vmatpush1.msra.mxu0 0.0
    %461 = vmatprep.subr.mxu0 0.0
    %462 = vmatpush1.msra.mxu0 0.0
    %463 = vmatprep.mubr.f32.mxu0 0.0
    %464 = vmatmul.mubr.f32.gmra.mrb[0].mxu0 %v388
    %v465 = vpop.f32.mrb[0].mxu0
    %v466 = vadd.f32 %v370, %v465
    %v467 = vpop.f32.mrb[0].mxu0
    %468 = vmatprep.mubr.f32.mxu0 0.0
    %469 = vmatmul.mubr.f32.gmra.mrb[0].mxu0 %v391
    %v470 = vpop.f32.mrb[0].mxu0
    %v471 = vadd.f32 %v375, %v470
    %v472 = vpop.f32.mrb[0].mxu0
    %473 = vmatprep.mubr.f32.mxu0 0.0
    %474 = vmatmul.mubr.f32.gmra.mrb[0].mxu0 %v394
    %v475 = vpop.f32.mrb[0].mxu0
    %v476 = vadd.f32 %v380, %v475
    %v477 = vpop.f32.mrb[0].mxu0
    %478 = vmatprep.mubr.f32.mxu0 0.0
    %479 = vmatmul.mubr.f32.gmra.mrb[0].mxu0 %v397
    %v480 = vpop.f32.mrb[0].mxu0
    %v481 = vadd.f32 %v385, %v480
    %v482 = vpop.f32.mrb[0].mxu0
    %483 = vdwg.mxu0
    %v484 = vmul.f32 %v466, 0.01
    %v485 = vmul.f32 %v471, 0.01
    %v486 = vmul.f32 %v476, 0.01
    %v487 = vmul.f32 %v481, 0.01
    %v488 = vmax.f32 %v466, %v484
    %v489 = vmax.f32 %v471, %v485
    %v490 = vmax.f32 %v476, %v486
    %v491 = vmax.f32 %v481, %v487
    %v492 = vld [vmem:[%s1 + $0x100] sm:$0xff]
    %v493 = vld [vmem:[%s1 + $0x108] sm:$0xff]
    %v494 = vld [vmem:[%s1 + $0x110] sm:$0xff]
    %v495 = vld [vmem:[%s1 + $0x118] sm:$0xff]
    %v496 = vld [vmem:[%s1 + $0x120] sm:$0xff]
    %v497 = vld [vmem:[%s1 + $0x128] sm:$0xff]
    %v498 = vld [vmem:[%s1 + $0x130] sm:$0xff]
    %v499 = vld [vmem:[%s1 + $0x138] sm:$0xff]
    %501 = vset.pattern.permute.xlu0 0
    %502 = vperm.xlu0 %501, %v496
    %v503 = vpop.permute.xlu0 %502
    %506 = vset.pattern.permute.xlu0 0
    %507 = vperm.xlu0 %506, %v497
    %v508 = vpop.permute.xlu0 %507
    %511 = vset.pattern.permute.xlu0 0
    %512 = vperm.xlu0 %511, %v498
    %v513 = vpop.permute.xlu0 %512
    %516 = vset.pattern.permute.xlu0 0
    %517 = vperm.xlu0 %516, %v499
    %v518 = vpop.permute.xlu0 %517
    %v521 = vsel %vm249, %v492, 0
    %v524 = vsel %vm249, %v493, 0
    %v527 = vsel %vm249, %v494, 0
    %v530 = vsel %vm249, %v495, 0
    %532 = vmatprep.subr.mxu0 0.0
    %533 = vmatpush1.msra.mxu0 %v488
    %534 = vmatprep.subr.mxu0 0.0
    %535 = vmatpush1.msra.mxu0 %v489
    %536 = vmatprep.subr.mxu0 0.0
    %537 = vmatpush1.msra.mxu0 %v490
    %538 = vmatprep.subr.mxu0 0.0
    %539 = vmatpush1.msra.mxu0 %v491
    %540 = vmatprep.subr.mxu0 0.0
    %541 = vmatpush1.msra.mxu0 0.0
    %542 = vmatprep.subr.mxu0 0.0
    %543 = vmatpush1.msra.mxu0 0.0
    %544 = vmatprep.subr.mxu0 0.0
    %545 = vmatpush1.msra.mxu0 0.0
    %546 = vmatprep.subr.mxu0 0.0
    %547 = vmatpush1.msra.mxu0 0.0
    %548 = vmatprep.subr.mxu0 0.0
    %549 = vmatpush1.msra.mxu0 0.0
    %550 = vmatprep.subr.mxu0 0.0
    %551 = vmatpush1.msra.mxu0 0.0
    %552 = vmatprep.subr.mxu0 0.0
    %553 = vmatpush1.msra.mxu0 0.0
    %554 = vmatprep.subr.mxu0 0.0
    %555 = vmatpush1.msra.mxu0 0.0
    %556 = vmatprep.subr.mxu0 0.0
    %557 = vmatpush1.msra.mxu0 0.0
    %558 = vmatprep.subr.mxu0 0.0
    %559 = vmatpush1.msra.mxu0 0.0
    %560 = vmatprep.subr.mxu0 0.0
    %561 = vmatpush1.msra.mxu0 0.0
    %562 = vmatprep.subr.mxu0 0.0
    %563 = vmatpush1.msra.mxu0 0.0
    %564 = vmatprep.subr.mxu0 0.0
    %565 = vmatpush1.msra.mxu0 0.0
    %566 = vmatprep.subr.mxu0 0.0
    %567 = vmatpush1.msra.mxu0 0.0
    %568 = vmatprep.subr.mxu0 0.0
    %569 = vmatpush1.msra.mxu0 0.0
    %570 = vmatprep.subr.mxu0 0.0
    %571 = vmatpush1.msra.mxu0 0.0
    %572 = vmatprep.subr.mxu0 0.0
    %573 = vmatpush1.msra.mxu0 0.0
    %574 = vmatprep.subr.mxu0 0.0
    %575 = vmatpush1.msra.mxu0 0.0
    %576 = vmatprep.subr.mxu0 0.0
    %577 = vmatpush1.msra.mxu0 0.0
    %578 = vmatprep.subr.mxu0 0.0
    %579 = vmatpush1.msra.mxu0 0.0
    %580 = vmatprep.subr.mxu0 0.0
    %581 = vmatpush1.msra.mxu0 0.0
    %582 = vmatprep.subr.mxu0 0.0
    %583 = vmatpush1.msra.mxu0 0.0
    %584 = vmatprep.subr.mxu0 0.0
    %585 = vmatpush1.msra.mxu0 0.0
    %586 = vmatprep.subr.mxu0 0.0
    %587 = vmatpush1.msra.mxu0 0.0
    %588 = vmatprep.subr.mxu0 0.0
    %589 = vmatpush1.msra.mxu0 0.0
    %590 = vmatprep.subr.mxu0 0.0
    %591 = vmatpush1.msra.mxu0 0.0
    %592 = vmatprep.subr.mxu0 0.0
    %593 = vmatpush1.msra.mxu0 0.0
    %594 = vmatprep.subr.mxu0 0.0
    %595 = vmatpush1.msra.mxu0 0.0
    %596 = vmatprep.mubr.f32.mxu0 0.0
    %597 = vmatmul.mubr.f32.gmra.mrb[0].mxu0 %v521
    %v598 = vpop.f32.mrb[0].mxu0
    %v599 = vadd.f32 %v503, %v598
    %v600 = vpop.f32.mrb[0].mxu0
    %601 = vmatprep.mubr.f32.mxu0 0.0
    %602 = vmatmul.mubr.f32.gmra.mrb[0].mxu0 %v524
    %v603 = vpop.f32.mrb[0].mxu0
    %v604 = vadd.f32 %v508, %v603
    %v605 = vpop.f32.mrb[0].mxu0
    %606 = vmatprep.mubr.f32.mxu0 0.0
    %607 = vmatmul.mubr.f32.gmra.mrb[0].mxu0 %v527
    %v608 = vpop.f32.mrb[0].mxu0
    %v609 = vadd.f32 %v513, %v608
    %v610 = vpop.f32.mrb[0].mxu0
    %611 = vmatprep.mubr.f32.mxu0 0.0
    %612 = vmatmul.mubr.f32.gmra.mrb[0].mxu0 %v530
    %v613 = vpop.f32.mrb[0].mxu0
    %v614 = vadd.f32 %v518, %v613
    %v615 = vpop.f32.mrb[0].mxu0
    %616 = vdwg.mxu0
    %v617 = vmul.f32 %v599, 0.01
    %v618 = vmul.f32 %v604, 0.01
    %v619 = vmul.f32 %v609, 0.01
    %v620 = vmul.f32 %v614, 0.01
    %v621 = vmax.f32 %v599, %v617
    %v622 = vmax.f32 %v604, %v618
    %v623 = vmax.f32 %v609, %v619
    %v624 = vmax.f32 %v614, %v620
    %v625 = vadd.f32 %v621, %v355
    %v626 = vadd.f32 %v622, %v356
    %v627 = vadd.f32 %v623, %v357
    %v628 = vadd.f32 %v624, %v358
    %v629 = vld [vmem:[%s1 + $0x140] sm:$0xff]
    %v630 = vld [vmem:[%s1 + $0x148] sm:$0xff]
    %v631 = vld [vmem:[%s1 + $0x150] sm:$0xff]
    %v632 = vld [vmem:[%s1 + $0x158] sm:$0xff]
    %v633 = vld [vmem:[%s1 + $0x160] sm:$0xff]
    %v634 = vld [vmem:[%s1 + $0x168] sm:$0xff]
    %v635 = vld [vmem:[%s1 + $0x170] sm:$0xff]
    %v636 = vld [vmem:[%s1 + $0x178] sm:$0xff]
    %v637 = vld [vmem:[%s1 + $0x180] sm:$0xff]
    %v638 = vld [vmem:[%s1 + $0x188] sm:$0xff]
    %v639 = vld [vmem:[%s1 + $0x190] sm:$0xff]
    %v640 = vld [vmem:[%s1 + $0x198] sm:$0xff]
    %v641 = vld [vmem:[%s1 + $0x1a0] sm:$0xff]
    %v642 = vld [vmem:[%s1 + $0x1a8] sm:$0xff]
    %v643 = vld [vmem:[%s1 + $0x1b0] sm:$0xff]
    %v644 = vld [vmem:[%s1 + $0x1b8] sm:$0xff]
    %v645 = vld [vmem:[%s1 + $0x1c0] sm:$0xff]
    %v646 = vld [vmem:[%s1 + $0x1c8] sm:$0xff]
    %v647 = vld [vmem:[%s1 + $0x1d0] sm:$0xff]
    %v648 = vld [vmem:[%s1 + $0x1d8] sm:$0xff]
    %v649 = vld [vmem:[%s1 + $0x1e0] sm:$0xff]
    %v650 = vld [vmem:[%s1 + $0x1e8] sm:$0xff]
    %v651 = vld [vmem:[%s1 + $0x1f0] sm:$0xff]
    %v652 = vld [vmem:[%s1 + $0x1f8] sm:$0xff]
    %v653 = vld [vmem:[%s1 + $0x200] sm:$0xff]
    %v654 = vld [vmem:[%s1 + $0x208] sm:$0xff]
    %v655 = vld [vmem:[%s1 + $0x210] sm:$0xff]
    %v656 = vld [vmem:[%s1 + $0x218] sm:$0xff]
    %v657 = vld [vmem:[%s1 + $0x220] sm:$0xff]
    %v658 = vld [vmem:[%s1 + $0x228] sm:$0xff]
    %v659 = vld [vmem:[%s1 + $0x230] sm:$0xff]
    %v660 = vld [vmem:[%s1 + $0x238] sm:$0xff]
    %662 = vset.pattern.permute.xlu0 0
    %663 = vperm.xlu0 %662, %v645
    %v664 = vpop.permute.xlu0 %663
    %667 = vset.pattern.permute.xlu0 0
    %668 = vperm.xlu0 %667, %v646
    %v669 = vpop.permute.xlu0 %668
    %672 = vset.pattern.permute.xlu0 0
    %673 = vperm.xlu0 %672, %v647
    %v674 = vpop.permute.xlu0 %673
    %677 = vset.pattern.permute.xlu0 0
    %678 = vperm.xlu0 %677, %v648
    %v679 = vpop.permute.xlu0 %678
    %682 = vset.pattern.permute.xlu0 0
    %683 = vperm.xlu0 %682, %v649
    %v684 = vpop.permute.xlu0 %683
    %687 = vset.pattern.permute.xlu0 0
    %688 = vperm.xlu0 %687, %v650
    %v689 = vpop.permute.xlu0 %688
    %692 = vset.pattern.permute.xlu0 0
    %693 = vperm.xlu0 %692, %v651
    %v694 = vpop.permute.xlu0 %693
    %697 = vset.pattern.permute.xlu0 0
    %698 = vperm.xlu0 %697, %v652
    %v699 = vpop.permute.xlu0 %698
    %702 = vset.pattern.permute.xlu0 0
    %703 = vperm.xlu0 %702, %v653
    %v704 = vpop.permute.xlu0 %703
    %707 = vset.pattern.permute.xlu0 0
    %708 = vperm.xlu0 %707, %v654
    %v709 = vpop.permute.xlu0 %708
    %712 = vset.pattern.permute.xlu0 0
    %713 = vperm.xlu0 %712, %v655
    %v714 = vpop.permute.xlu0 %713
    %717 = vset.pattern.permute.xlu0 0
    %718 = vperm.xlu0 %717, %v656
    %v719 = vpop.permute.xlu0 %718
    %722 = vset.pattern.permute.xlu0 0
    %723 = vperm.xlu0 %722, %v657
    %v724 = vpop.permute.xlu0 %723
    %727 = vset.pattern.permute.xlu0 0
    %728 = vperm.xlu0 %727, %v658
    %v729 = vpop.permute.xlu0 %728
    %732 = vset.pattern.permute.xlu0 0
    %733 = vperm.xlu0 %732, %v659
    %v734 = vpop.permute.xlu0 %733
    %737 = vset.pattern.permute.xlu0 0
    %738 = vperm.xlu0 %737, %v660
    %v739 = vpop.permute.xlu0 %738
    %v742 = vsel %vm249, %v629, 0
    %v745 = vsel %vm249, %v630, 0
    %v748 = vsel %vm249, %v631, 0
    %v751 = vsel %vm249, %v632, 0
    %v754 = vsel %vm249, %v633, 0
    %v757 = vsel %vm249, %v634, 0
    %v760 = vsel %vm249, %v635, 0
    %v763 = vsel %vm249, %v636, 0
    %v766 = vsel %vm249, %v637, 0
    %v769 = vsel %vm249, %v638, 0
    %v772 = vsel %vm249, %v639, 0
    %v775 = vsel %vm249, %v640, 0
    %v778 = vsel %vm249, %v641, 0
    %v781 = vsel %vm249, %v642, 0
    %v784 = vsel %vm249, %v643, 0
    %v787 = vsel %vm249, %v644, 0
    %789 = vmatprep.subr.mxu0 0.0
    %790 = vmatpush1.msra.mxu0 %v625
    %791 = vmatprep.subr.mxu0 0.0
    %792 = vmatpush1.msra.mxu0 %v626
    %793 = vmatprep.subr.mxu0 0.0
    %794 = vmatpush1.msra.mxu0 %v627
    %795 = vmatprep.subr.mxu0 0.0
    %796 = vmatpush1.msra.mxu0 %v628
    %797 = vmatprep.subr.mxu0 0.0
    %798 = vmatpush1.msra.mxu0 0.0
    %799 = vmatprep.subr.mxu0 0.0
    %800 = vmatpush1.msra.mxu0 0.0
    %801 = vmatprep.subr.mxu0 0.0
    %802 = vmatpush1.msra.mxu0 0.0
    %803 = vmatprep.subr.mxu0 0.0
    %804 = vmatpush1.msra.mxu0 0.0
    %805 = vmatprep.subr.mxu0 0.0
    %806 = vmatpush1.msra.mxu0 0.0
    %807 = vmatprep.subr.mxu0 0.0
    %808 = vmatpush1.msra.mxu0 0.0
    %809 = vmatprep.subr.mxu0 0.0
    %810 = vmatpush1.msra.mxu0 0.0
    %811 = vmatprep.subr.mxu0 0.0
    %812 = vmatpush1.msra.mxu0 0.0
    %813 = vmatprep.subr.mxu0 0.0
    %814 = vmatpush1.msra.mxu0 0.0
    %815 = vmatprep.subr.mxu0 0.0
    %816 = vmatpush1.msra.mxu0 0.0
    %817 = vmatprep.subr.mxu0 0.0
    %818 = vmatpush1.msra.mxu0 0.0
    %819 = vmatprep.subr.mxu0 0.0
    %820 = vmatpush1.msra.mxu0 0.0
    %821 = vmatprep.subr.mxu0 0.0
    %822 = vmatpush1.msra.mxu0 0.0
    %823 = vmatprep.subr.mxu0 0.0
    %824 = vmatpush1.msra.mxu0 0.0
    %825 = vmatprep.subr.mxu0 0.0
    %826 = vmatpush1.msra.mxu0 0.0
    %827 = vmatprep.subr.mxu0 0.0
    %828 = vmatpush1.msra.mxu0 0.0
    %829 = vmatprep.subr.mxu0 0.0
    %830 = vmatpush1.msra.mxu0 0.0
    %831 = vmatprep.subr.mxu0 0.0
    %832 = vmatpush1.msra.mxu0 0.0
    %833 = vmatprep.subr.mxu0 0.0
    %834 = vmatpush1.msra.mxu0 0.0
    %835 = vmatprep.subr.mxu0 0.0
    %836 = vmatpush1.msra.mxu0 0.0
    %837 = vmatprep.subr.mxu0 0.0
    %838 = vmatpush1.msra.mxu0 0.0
    %839 = vmatprep.subr.mxu0 0.0
    %840 = vmatpush1.msra.mxu0 0.0
    %841 = vmatprep.subr.mxu0 0.0
    %842 = vmatpush1.msra.mxu0 0.0
    %843 = vmatprep.subr.mxu0 0.0
    %844 = vmatpush1.msra.mxu0 0.0
    %845 = vmatprep.subr.mxu0 0.0
    %846 = vmatpush1.msra.mxu0 0.0
    %847 = vmatprep.subr.mxu0 0.0
    %848 = vmatpush1.msra.mxu0 0.0
    %849 = vmatprep.subr.mxu0 0.0
    %850 = vmatpush1.msra.mxu0 0.0
    %851 = vmatprep.subr.mxu0 0.0
    %852 = vmatpush1.msra.mxu0 0.0
    %853 = vmatprep.mubr.f32.mxu0 0.0
    %854 = vmatmul.mubr.f32.gmra.mrb[0].mxu0 %v742
    %v855 = vpop.f32.mrb[0].mxu0
    %v856 = vadd.f32 %v664, %v855
    %v857 = vpop.f32.mrb[0].mxu0
    %858 = vmatprep.mubr.f32.mxu0 0.0
    %859 = vmatmul.mubr.f32.gmra.mrb[0].mxu0 %v745
    %v860 = vpop.f32.mrb[0].mxu0
    %v861 = vadd.f32 %v669, %v860
    %v862 = vpop.f32.mrb[0].mxu0
    %863 = vmatprep.mubr.f32.mxu0 0.0
    %864 = vmatmul.mubr.f32.gmra.mrb[0].mxu0 %v748
    %v865 = vpop.f32.mrb[0].mxu0
    %v866 = vadd.f32 %v674, %v865
    %v867 = vpop.f32.mrb[0].mxu0
    %868 = vmatprep.mubr.f32.mxu0 0.0
    %869 = vmatmul.mubr.f32.gmra.mrb[0].mxu0 %v751
    %v870 = vpop.f32.mrb[0].mxu0
    %v871 = vadd.f32 %v679, %v870
    %v872 = vpop.f32.mrb[0].mxu0
    %873 = vmatprep.mubr.f32.mxu0 0.0
    %874 = vmatmul.mubr.f32.gmra.mrb[0].mxu0 %v754
    %v875 = vpop.f32.mrb[0].mxu0
    %v876 = vadd.f32 %v684, %v875
    %v877 = vpop.f32.mrb[0].mxu0
    %878 = vmatprep.mubr.f32.mxu0 0.0
    %879 = vmatmul.mubr.f32.gmra.mrb[0].mxu0 %v757
    %v880 = vpop.f32.mrb[0].mxu0
    %v881 = vadd.f32 %v689, %v880
    %v882 = vpop.f32.mrb[0].mxu0
    %883 = vmatprep.mubr.f32.mxu0 0.0
    %884 = vmatmul.mubr.f32.gmra.mrb[0].mxu0 %v760
    %v885 = vpop.f32.mrb[0].mxu0
    %v886 = vadd.f32 %v694, %v885
    %v887 = vpop.f32.mrb[0].mxu0
    %888 = vmatprep.mubr.f32.mxu0 0.0
    %889 = vmatmul.mubr.f32.gmra.mrb[0].mxu0 %v763
    %v890 = vpop.f32.mrb[0].mxu0
    %v891 = vadd.f32 %v699, %v890
    %v892 = vpop.f32.mrb[0].mxu0
    %893 = vmatprep.mubr.f32.mxu0 0.0
    %894 = vmatmul.mubr.f32.gmra.mrb[0].mxu0 %v766
    %v895 = vpop.f32.mrb[0].mxu0
    %v896 = vadd.f32 %v704, %v895
    %v897 = vpop.f32.mrb[0].mxu0
    %898 = vmatprep.mubr.f32.mxu0 0.0
    %899 = vmatmul.mubr.f32.gmra.mrb[0].mxu0 %v769
    %v900 = vpop.f32.mrb[0].mxu0
    %v901 = vadd.f32 %v709, %v900
    %v902 = vpop.f32.mrb[0].mxu0
    %903 = vmatprep.mubr.f32.mxu0 0.0
    %904 = vmatmul.mubr.f32.gmra.mrb[0].mxu0 %v772
    %v905 = vpop.f32.mrb[0].mxu0
    %v906 = vadd.f32 %v714, %v905
    %v907 = vpop.f32.mrb[0].mxu0
    %908 = vmatprep.mubr.f32.mxu0 0.0
    %909 = vmatmul.mubr.f32.gmra.mrb[0].mxu0 %v775
    %v910 = vpop.f32.mrb[0].mxu0
    %v911 = vadd.f32 %v719, %v910
    %v912 = vpop.f32.mrb[0].mxu0
    %913 = vmatprep.mubr.f32.mxu0 0.0
    %914 = vmatmul.mubr.f32.gmra.mrb[0].mxu0 %v778
    %v915 = vpop.f32.mrb[0].mxu0
    %v916 = vadd.f32 %v724, %v915
    %v917 = vpop.f32.mrb[0].mxu0
    %918 = vmatprep.mubr.f32.mxu0 0.0
    %919 = vmatmul.mubr.f32.gmra.mrb[0].mxu0 %v781
    %v920 = vpop.f32.mrb[0].mxu0
    %v921 = vadd.f32 %v729, %v920
    %v922 = vpop.f32.mrb[0].mxu0
    %923 = vmatprep.mubr.f32.mxu0 0.0
    %924 = vmatmul.mubr.f32.gmra.mrb[0].mxu0 %v784
    %v925 = vpop.f32.mrb[0].mxu0
    %v926 = vadd.f32 %v734, %v925
    %v927 = vpop.f32.mrb[0].mxu0
    %928 = vmatprep.mubr.f32.mxu0 0.0
    %929 = vmatmul.mubr.f32.gmra.mrb[0].mxu0 %v787
    %v930 = vpop.f32.mrb[0].mxu0
    %v931 = vadd.f32 %v739, %v930
    %v932 = vpop.f32.mrb[0].mxu0
    %933 = vdwg.mxu0
    %v934 = vmul.f32 %v856, 0.01
    %v935 = vmul.f32 %v861, 0.01
    %v936 = vmul.f32 %v866, 0.01
    %v937 = vmul.f32 %v871, 0.01
    %v938 = vmul.f32 %v876, 0.01
    %v939 = vmul.f32 %v881, 0.01
    %v940 = vmul.f32 %v886, 0.01
    %v941 = vmul.f32 %v891, 0.01
    %v942 = vmax.f32 %v856, %v934
    %v943 = vmax.f32 %v861, %v935
    %v944 = vmax.f32 %v866, %v936
    %v945 = vmax.f32 %v871, %v937
    %v946 = vmax.f32 %v876, %v938
    %v947 = vmax.f32 %v881, %v939
    %v948 = vmax.f32 %v886, %v940
    %v949 = vmax.f32 %v891, %v941
    %v950 = vld [vmem:[%s1 + $0x240] sm:$0xff]
    %v951 = vld [vmem:[%s1 + $0x248] sm:$0xff]
    %v952 = vld [vmem:[%s1 + $0x250] sm:$0xff]
    %v953 = vld [vmem:[%s1 + $0x258] sm:$0xff]
    %v954 = vld [vmem:[%s1 + $0x260] sm:$0xff]
    %v955 = vld [vmem:[%s1 + $0x268] sm:$0xff]
    %v956 = vld [vmem:[%s1 + $0x270] sm:$0xff]
    %v957 = vld [vmem:[%s1 + $0x278] sm:$0xff]
    %v958 = vld [vmem:[%s1 + $0x280] sm:$0xff]
    %v959 = vld [vmem:[%s1 + $0x288] sm:$0xff]
    %v960 = vld [vmem:[%s1 + $0x290] sm:$0xff]
    %v961 = vld [vmem:[%s1 + $0x298] sm:$0xff]
    %v962 = vld [vmem:[%s1 + $0x2a0] sm:$0xff]
    %v963 = vld [vmem:[%s1 + $0x2a8] sm:$0xff]
    %v964 = vld [vmem:[%s1 + $0x2b0] sm:$0xff]
    %v965 = vld [vmem:[%s1 + $0x2b8] sm:$0xff]
    %967 = vset.pattern.permute.xlu0 0
    %968 = vperm.xlu0 %967, %v958
    %v969 = vpop.permute.xlu0 %968
    %972 = vset.pattern.permute.xlu0 0
    %973 = vperm.xlu0 %972, %v959
    %v974 = vpop.permute.xlu0 %973
    %977 = vset.pattern.permute.xlu0 0
    %978 = vperm.xlu0 %977, %v960
    %v979 = vpop.permute.xlu0 %978
    %982 = vset.pattern.permute.xlu0 0
    %983 = vperm.xlu0 %982, %v961
    %v984 = vpop.permute.xlu0 %983
    %987 = vset.pattern.permute.xlu0 0
    %988 = vperm.xlu0 %987, %v962
    %v989 = vpop.permute.xlu0 %988
    %992 = vset.pattern.permute.xlu0 0
    %993 = vperm.xlu0 %992, %v963
    %v994 = vpop.permute.xlu0 %993
    %997 = vset.pattern.permute.xlu0 0
    %998 = vperm.xlu0 %997, %v964
    %v999 = vpop.permute.xlu0 %998
    %1002 = vset.pattern.permute.xlu0 0
    %1003 = vperm.xlu0 %1002, %v965
    %v1004 = vpop.permute.xlu0 %1003
    %vm1006 = vcmask 523264
    %v1008 = vsel %vm1006, %v950, 0
    %v1011 = vsel %vm1006, %v951, 0
    %v1014 = vsel %vm1006, %v952, 0
    %v1017 = vsel %vm1006, %v953, 0
    %v1020 = vsel %vm1006, %v954, 0
    %v1023 = vsel %vm1006, %v955, 0
    %v1026 = vsel %vm1006, %v956, 0
    %v1029 = vsel %vm1006, %v957, 0
    %1031 = vmatprep.subr.mxu0 0.0
    %1032 = vmatpush1.msra.mxu0 %v942
    %1033 = vmatprep.subr.mxu0 0.0
    %1034 = vmatpush1.msra.mxu0 %v943
    %1035 = vmatprep.subr.mxu0 0.0
    %1036 = vmatpush1.msra.mxu0 %v944
    %1037 = vmatprep.subr.mxu0 0.0
    %1038 = vmatpush1.msra.mxu0 %v945
    %1039 = vmatprep.subr.mxu0 0.0
    %1040 = vmatpush1.msra.mxu0 %v946
    %1041 = vmatprep.subr.mxu0 0.0
    %1042 = vmatpush1.msra.mxu0 %v947
    %1043 = vmatprep.subr.mxu0 0.0
    %1044 = vmatpush1.msra.mxu0 %v948
    %1045 = vmatprep.subr.mxu0 0.0
    %1046 = vmatpush1.msra.mxu0 %v949
    %1047 = vmatprep.subr.mxu0 0.0
    %1048 = vmatpush1.msra.mxu0 0.0
    %1049 = vmatprep.subr.mxu0 0.0
    %1050 = vmatpush1.msra.mxu0 0.0
    %1051 = vmatprep.subr.mxu0 0.0
    %1052 = vmatpush1.msra.mxu0 0.0
    %1053 = vmatprep.subr.mxu0 0.0
    %1054 = vmatpush1.msra.mxu0 0.0
    %1055 = vmatprep.subr.mxu0 0.0
    %1056 = vmatpush1.msra.mxu0 0.0
    %1057 = vmatprep.subr.mxu0 0.0
    %1058 = vmatpush1.msra.mxu0 0.0
    %1059 = vmatprep.subr.mxu0 0.0
    %1060 = vmatpush1.msra.mxu0 0.0
    %1061 = vmatprep.subr.mxu0 0.0
    %1062 = vmatpush1.msra.mxu0 0.0
    %1063 = vmatprep.subr.mxu0 0.0
    %1064 = vmatpush1.msra.mxu0 0.0
    %1065 = vmatprep.subr.mxu0 0.0
    %1066 = vmatpush1.msra.mxu0 0.0
    %1067 = vmatprep.subr.mxu0 0.0
    %1068 = vmatpush1.msra.mxu0 0.0
    %1069 = vmatprep.subr.mxu0 0.0
    %1070 = vmatpush1.msra.mxu0 0.0
    %1071 = vmatprep.subr.mxu0 0.0
    %1072 = vmatpush1.msra.mxu0 0.0
    %1073 = vmatprep.subr.mxu0 0.0
    %1074 = vmatpush1.msra.mxu0 0.0
    %1075 = vmatprep.subr.mxu0 0.0
    %1076 = vmatpush1.msra.mxu0 0.0
    %1077 = vmatprep.subr.mxu0 0.0
    %1078 = vmatpush1.msra.mxu0 0.0
    %1079 = vmatprep.subr.mxu0 0.0
    %1080 = vmatpush1.msra.mxu0 0.0
    %1081 = vmatprep.subr.mxu0 0.0
    %1082 = vmatpush1.msra.mxu0 0.0
    %1083 = vmatprep.subr.mxu0 0.0
    %1084 = vmatpush1.msra.mxu0 0.0
    %1085 = vmatprep.subr.mxu0 0.0
    %1086 = vmatpush1.msra.mxu0 0.0
    %1087 = vmatprep.subr.mxu0 0.0
    %1088 = vmatpush1.msra.mxu0 0.0
    %1089 = vmatprep.subr.mxu0 0.0
    %1090 = vmatpush1.msra.mxu0 0.0
    %1091 = vmatprep.subr.mxu0 0.0
    %1092 = vmatpush1.msra.mxu0 0.0
    %1093 = vmatprep.subr.mxu0 0.0
    %1094 = vmatpush1.msra.mxu0 0.0
    %1095 = vmatprep.mubr.f32.mxu0 0.0
    %1096 = vmatmul.mubr.f32.gmra.mrb[0].mxu0 %v1008
    %v1097 = vpop.f32.mrb[0].mxu0
    %v1098 = vadd.f32 %v969, %v1097
    %v1099 = vpop.f32.mrb[0].mxu0
    %1100 = vmatprep.mubr.f32.mxu0 0.0
    %1101 = vmatmul.mubr.f32.gmra.mrb[0].mxu0 %v1011
    %v1102 = vpop.f32.mrb[0].mxu0
    %v1103 = vadd.f32 %v974, %v1102
    %v1104 = vpop.f32.mrb[0].mxu0
    %1105 = vmatprep.mubr.f32.mxu0 0.0
    %1106 = vmatmul.mubr.f32.gmra.mrb[0].mxu0 %v1014
    %v1107 = vpop.f32.mrb[0].mxu0
    %v1108 = vadd.f32 %v979, %v1107
    %v1109 = vpop.f32.mrb[0].mxu0
    %1110 = vmatprep.mubr.f32.mxu0 0.0
    %1111 = vmatmul.mubr.f32.gmra.mrb[0].mxu0 %v1017
    %v1112 = vpop.f32.mrb[0].mxu0
    %v1113 = vadd.f32 %v984, %v1112
    %v1114 = vpop.f32.mrb[0].mxu0
    %1115 = vmatprep.mubr.f32.mxu0 0.0
    %1116 = vmatmul.mubr.f32.gmra.mrb[0].mxu0 %v1020
    %v1117 = vpop.f32.mrb[0].mxu0
    %v1118 = vadd.f32 %v989, %v1117
    %v1119 = vpop.f32.mrb[0].mxu0
    %1120 = vmatprep.mubr.f32.mxu0 0.0
    %1121 = vmatmul.mubr.f32.gmra.mrb[0].mxu0 %v1023
    %v1122 = vpop.f32.mrb[0].mxu0
    %v1123 = vadd.f32 %v994, %v1122
    %v1124 = vpop.f32.mrb[0].mxu0
    %1125 = vmatprep.mubr.f32.mxu0 0.0
    %1126 = vmatmul.mubr.f32.gmra.mrb[0].mxu0 %v1026
    %v1127 = vpop.f32.mrb[0].mxu0
    %v1128 = vadd.f32 %v999, %v1127
    %v1129 = vpop.f32.mrb[0].mxu0
    %1130 = vmatprep.mubr.f32.mxu0 0.0
    %1131 = vmatmul.mubr.f32.gmra.mrb[0].mxu0 %v1029
    %v1132 = vpop.f32.mrb[0].mxu0
    %v1133 = vadd.f32 %v1004, %v1132
    %v1134 = vpop.f32.mrb[0].mxu0
    %1135 = vdwg.mxu0
    %v1136 = vmul.f32 %v1098, 0.01
    %v1137 = vmul.f32 %v1103, 0.01
    %v1138 = vmul.f32 %v1108, 0.01
    %v1139 = vmul.f32 %v1113, 0.01
    %v1140 = vmul.f32 %v1118, 0.01
    %v1141 = vmul.f32 %v1123, 0.01
    %v1142 = vmul.f32 %v1128, 0.01
    %v1143 = vmul.f32 %v1133, 0.01
    %v1144 = vmax.f32 %v1098, %v1136
    %v1145 = vmax.f32 %v1103, %v1137
    %v1146 = vmax.f32 %v1108, %v1138
    %v1147 = vmax.f32 %v1113, %v1139
    %v1148 = vmax.f32 %v1118, %v1140
    %v1149 = vmax.f32 %v1123, %v1141
    %v1150 = vmax.f32 %v1128, %v1142
    %v1151 = vmax.f32 %v1133, %v1143
    %v1152 = vadd.f32 %v1144, %v896
    %v1153 = vadd.f32 %v1145, %v901
    %v1154 = vadd.f32 %v1146, %v906
    %v1155 = vadd.f32 %v1147, %v911
    %v1156 = vadd.f32 %v1148, %v916
    %v1157 = vadd.f32 %v1149, %v921
    %v1158 = vadd.f32 %v1150, %v926
    %v1159 = vadd.f32 %v1151, %v931
    %1160 = vxpose.xlu0.b32.start [1/16] %v1152, 128
    %1161 = vxpose.xlu0.b32.cont [2/16] %v1153, 128
    %1162 = vxpose.xlu0.b32.cont [3/16] %v1154, 128
    %1163 = vxpose.xlu0.b32.cont [4/16] %v1155, 128
    %1164 = vxpose.xlu0.b32.cont [5/16] %v1156, 128
    %1165 = vxpose.xlu0.b32.cont [6/16] %v1157, 128
    %1166 = vxpose.xlu0.b32.cont [7/16] %v1158, 128
    %1167 = vxpose.xlu0.b32.cont [8/16] %v1159, 128
    %1168 = vxpose.xlu0.b32.cont [9/16] 0.0, 128
    %1169 = vxpose.xlu0.b32.cont [10/16] 0.0, 128
    %1170 = vxpose.xlu0.b32.cont [11/16] 0.0, 128
    %1171 = vxpose.xlu0.b32.cont [12/16] 0.0, 128
    %1172 = vxpose.xlu0.b32.cont [13/16] 0.0, 128
    %1173 = vxpose.xlu0.b32.cont [14/16] 0.0, 128
    %1174 = vxpose.xlu0.b32.cont [15/16] 0.0, 128
    %1175 = vxpose.xlu0.b32.end [16/16] 0.0, 128
    %v1176 = vpop.trf.xlu0
    %v1177 = vpop.trf.xlu0
    %v1178 = vpop.trf.xlu0
    %v1179 = vpop.trf.xlu0
    %v1180 = vpop.trf.xlu0
    %v1181 = vpop.trf.xlu0
    %v1182 = vpop.trf.xlu0
    %v1183 = vpop.trf.xlu0
    %v1184 = vpop.trf.xlu0
    %v1185 = vpop.trf.xlu0
    %v1186 = vpop.trf.xlu0
    %v1187 = vpop.trf.xlu0
    %v1188 = vpop.trf.xlu0
    %v1189 = vpop.trf.xlu0
    %v1190 = vpop.trf.xlu0
    %v1191 = vpop.trf.xlu0
    %v1192 = vld [vmem:[%s1 + $0x2c0] sm:$0xff]
    %v1193 = vld [vmem:[%s1 + $0x2c8] sm:$0xff]
    %v1194 = vld [vmem:[%s1 + $0x2d0] sm:$0xff]
    %v1195 = vld [vmem:[%s1 + $0x2d8] sm:$0xff]
    %v1196 = vld [vmem:[%s1 + $0x2e0] sm:$0xff]
    %v1197 = vld [vmem:[%s1 + $0x2e8] sm:$0xff]
    %v1198 = vld [vmem:[%s1 + $0x2f0] sm:$0xff]
    %v1199 = vld [vmem:[%s1 + $0x2f8] sm:$0xff]
    %v1200 = vld [vmem:[%s1 + $0x300] sm:$0x1]
    %v1201 = vlaneseq
    %v1202 = vshrl.u32 %v1201, 7
    %v1203 = vsub.s32 0, %v1202
    %v1204 = vrot.slane %v1200, %v1203
    %v1206 = vsel %vm1006, %v1176, 0
    %v1209 = vsel %vm1006, %v1177, 0
    %v1212 = vsel %vm1006, %v1178, 0
    %v1215 = vsel %vm1006, %v1179, 0
    %v1218 = vsel %vm1006, %v1180, 0
    %v1221 = vsel %vm1006, %v1181, 0
    %v1224 = vsel %vm1006, %v1182, 0
    %v1227 = vsel %vm1006, %v1183, 0
    %v1230 = vsel %vm1006, %v1184, 0
    %v1233 = vsel %vm1006, %v1185, 0
    %v1236 = vsel %vm1006, %v1186, 0
    %v1239 = vsel %vm1006, %v1187, 0
    %v1242 = vsel %vm1006, %v1188, 0
    %v1245 = vsel %vm1006, %v1189, 0
    %v1248 = vsel %vm1006, %v1190, 0
    %v1251 = vsel %vm1006, %v1191, 0
    %1253 = vmatprep.subr.mxu0 0.0
    %1254 = vmatpush1.msra.mxu0 %v1192
    %1255 = vmatprep.subr.mxu0 0.0
    %1256 = vmatpush1.msra.mxu0 %v1193
    %1257 = vmatprep.subr.mxu0 0.0
    %1258 = vmatpush1.msra.mxu0 %v1194
    %1259 = vmatprep.subr.mxu0 0.0
    %1260 = vmatpush1.msra.mxu0 %v1195
    %1261 = vmatprep.subr.mxu0 0.0
    %1262 = vmatpush1.msra.mxu0 %v1196
    %1263 = vmatprep.subr.mxu0 0.0
    %1264 = vmatpush1.msra.mxu0 %v1197
    %1265 = vmatprep.subr.mxu0 0.0
    %1266 = vmatpush1.msra.mxu0 %v1198
    %1267 = vmatprep.subr.mxu0 0.0
    %1268 = vmatpush1.msra.mxu0 %v1199
    %1269 = vmatprep.subr.mxu0 0.0
    %1270 = vmatpush1.msra.mxu0 0.0
    %1271 = vmatprep.subr.mxu0 0.0
    %1272 = vmatpush1.msra.mxu0 0.0
    %1273 = vmatprep.subr.mxu0 0.0
    %1274 = vmatpush1.msra.mxu0 0.0
    %1275 = vmatprep.subr.mxu0 0.0
    %1276 = vmatpush1.msra.mxu0 0.0
    %1277 = vmatprep.subr.mxu0 0.0
    %1278 = vmatpush1.msra.mxu0 0.0
    %1279 = vmatprep.subr.mxu0 0.0
    %1280 = vmatpush1.msra.mxu0 0.0
    %1281 = vmatprep.subr.mxu0 0.0
    %1282 = vmatpush1.msra.mxu0 0.0
    %1283 = vmatprep.subr.mxu0 0.0
    %1284 = vmatpush1.msra.mxu0 0.0
    %1285 = vmatprep.subr.mxu0 0.0
    %1286 = vmatpush1.msra.mxu0 0.0
    %1287 = vmatprep.subr.mxu0 0.0
    %1288 = vmatpush1.msra.mxu0 0.0
    %1289 = vmatprep.subr.mxu0 0.0
    %1290 = vmatpush1.msra.mxu0 0.0
    %1291 = vmatprep.subr.mxu0 0.0
    %1292 = vmatpush1.msra.mxu0 0.0
    %1293 = vmatprep.subr.mxu0 0.0
    %1294 = vmatpush1.msra.mxu0 0.0
    %1295 = vmatprep.subr.mxu0 0.0
    %1296 = vmatpush1.msra.mxu0 0.0
    %1297 = vmatprep.subr.mxu0 0.0
    %1298 = vmatpush1.msra.mxu0 0.0
    %1299 = vmatprep.subr.mxu0 0.0
    %1300 = vmatpush1.msra.mxu0 0.0
    %1301 = vmatprep.subr.mxu0 0.0
    %1302 = vmatpush1.msra.mxu0 0.0
    %1303 = vmatprep.subr.mxu0 0.0
    %1304 = vmatpush1.msra.mxu0 0.0
    %1305 = vmatprep.subr.mxu0 0.0
    %1306 = vmatpush1.msra.mxu0 0.0
    %1307 = vmatprep.subr.mxu0 0.0
    %1308 = vmatpush1.msra.mxu0 0.0
    %1309 = vmatprep.subr.mxu0 0.0
    %1310 = vmatpush1.msra.mxu0 0.0
    %1311 = vmatprep.subr.mxu0 0.0
    %1312 = vmatpush1.msra.mxu0 0.0
    %1313 = vmatprep.subr.mxu0 0.0
    %1314 = vmatpush1.msra.mxu0 0.0
    %1315 = vmatprep.subr.mxu0 0.0
    %1316 = vmatpush1.msra.mxu0 0.0
    %1317 = vmatprep.mubr.f32.mxu0 0.0
    %1318 = vmatmul.mubr.f32.gmra.mrb[0].mxu0 %v1206
    %v1319 = vpop.f32.mrb[0].mxu0
    %v1320 = vadd.f32 %v1204, %v1319
    %v1321 = vpop.f32.mrb[0].mxu0
    %1322 = vmatprep.mubr.f32.mxu0 0.0
    %1323 = vmatmul.mubr.f32.gmra.mrb[0].mxu0 %v1209
    %v1324 = vpop.f32.mrb[0].mxu0
    %v1325 = vadd.f32 %v1204, %v1324
    %v1326 = vpop.f32.mrb[0].mxu0
    %1327 = vmatprep.mubr.f32.mxu0 0.0
    %1328 = vmatmul.mubr.f32.gmra.mrb[0].mxu0 %v1212
    %v1329 = vpop.f32.mrb[0].mxu0
    %v1330 = vadd.f32 %v1204, %v1329
    %v1331 = vpop.f32.mrb[0].mxu0
    %1332 = vmatprep.mubr.f32.mxu0 0.0
    %1333 = vmatmul.mubr.f32.gmra.mrb[0].mxu0 %v1215
    %v1334 = vpop.f32.mrb[0].mxu0
    %v1335 = vadd.f32 %v1204, %v1334
    %v1336 = vpop.f32.mrb[0].mxu0
    %1337 = vmatprep.mubr.f32.mxu0 0.0
    %1338 = vmatmul.mubr.f32.gmra.mrb[0].mxu0 %v1218
    %v1339 = vpop.f32.mrb[0].mxu0
    %v1340 = vadd.f32 %v1204, %v1339
    %v1341 = vpop.f32.mrb[0].mxu0
    %1342 = vmatprep.mubr.f32.mxu0 0.0
    %1343 = vmatmul.mubr.f32.gmra.mrb[0].mxu0 %v1221
    %v1344 = vpop.f32.mrb[0].mxu0
    %v1345 = vadd.f32 %v1204, %v1344
    %v1346 = vpop.f32.mrb[0].mxu0
    %1347 = vmatprep.mubr.f32.mxu0 0.0
    %1348 = vmatmul.mubr.f32.gmra.mrb[0].mxu0 %v1224
    %v1349 = vpop.f32.mrb[0].mxu0
    %v1350 = vadd.f32 %v1204, %v1349
    %v1351 = vpop.f32.mrb[0].mxu0
    %1352 = vmatprep.mubr.f32.mxu0 0.0
    %1353 = vmatmul.mubr.f32.gmra.mrb[0].mxu0 %v1227
    %v1354 = vpop.f32.mrb[0].mxu0
    %v1355 = vadd.f32 %v1204, %v1354
    %v1356 = vpop.f32.mrb[0].mxu0
    %1357 = vmatprep.mubr.f32.mxu0 0.0
    %1358 = vmatmul.mubr.f32.gmra.mrb[0].mxu0 %v1230
    %v1359 = vpop.f32.mrb[0].mxu0
    %v1360 = vadd.f32 %v1204, %v1359
    %v1361 = vpop.f32.mrb[0].mxu0
    %1362 = vmatprep.mubr.f32.mxu0 0.0
    %1363 = vmatmul.mubr.f32.gmra.mrb[0].mxu0 %v1233
    %v1364 = vpop.f32.mrb[0].mxu0
    %v1365 = vadd.f32 %v1204, %v1364
    %v1366 = vpop.f32.mrb[0].mxu0
    %1367 = vmatprep.mubr.f32.mxu0 0.0
    %1368 = vmatmul.mubr.f32.gmra.mrb[0].mxu0 %v1236
    %v1369 = vpop.f32.mrb[0].mxu0
    %v1370 = vadd.f32 %v1204, %v1369
    %v1371 = vpop.f32.mrb[0].mxu0
    %1372 = vmatprep.mubr.f32.mxu0 0.0
    %1373 = vmatmul.mubr.f32.gmra.mrb[0].mxu0 %v1239
    %v1374 = vpop.f32.mrb[0].mxu0
    %v1375 = vadd.f32 %v1204, %v1374
    %v1376 = vpop.f32.mrb[0].mxu0
    %1377 = vmatprep.mubr.f32.mxu0 0.0
    %1378 = vmatmul.mubr.f32.gmra.mrb[0].mxu0 %v1242
    %v1379 = vpop.f32.mrb[0].mxu0
    %v1380 = vadd.f32 %v1204, %v1379
    %v1381 = vpop.f32.mrb[0].mxu0
    %1382 = vmatprep.mubr.f32.mxu0 0.0
    %1383 = vmatmul.mubr.f32.gmra.mrb[0].mxu0 %v1245
    %v1384 = vpop.f32.mrb[0].mxu0
    %v1385 = vadd.f32 %v1204, %v1384
    %v1386 = vpop.f32.mrb[0].mxu0
    %1387 = vmatprep.mubr.f32.mxu0 0.0
    %1388 = vmatmul.mubr.f32.gmra.mrb[0].mxu0 %v1248
    %v1389 = vpop.f32.mrb[0].mxu0
    %v1390 = vadd.f32 %v1204, %v1389
    %v1391 = vpop.f32.mrb[0].mxu0
    %1392 = vmatprep.mubr.f32.mxu0 0.0
    %1393 = vmatmul.mubr.f32.gmra.mrb[0].mxu0 %v1251
    %v1394 = vpop.f32.mrb[0].mxu0
    %v1395 = vadd.f32 %v1204, %v1394
    %v1396 = vpop.f32.mrb[0].mxu0
    %1397 = vdwg.mxu0
    %s1398 = scalar_lea.vmem %s2, %s17
    %1399 = vst [vmem:[%s1398] sm:$0xff] %v1320
    %1400 = vst [vmem:[%s1398 + $0x8] sm:$0xff] %v1325
    %1401 = vst [vmem:[%s1398 + $0x10] sm:$0xff] %v1330
    %1402 = vst [vmem:[%s1398 + $0x18] sm:$0xff] %v1335
    %1403 = vst [vmem:[%s1398 + $0x20] sm:$0xff] %v1340
    %1404 = vst [vmem:[%s1398 + $0x28] sm:$0xff] %v1345
    %1405 = vst [vmem:[%s1398 + $0x30] sm:$0xff] %v1350
    %1406 = vst [vmem:[%s1398 + $0x38] sm:$0xff] %v1355
    %1407 = vst [vmem:[%s1398 + $0x40] sm:$0xff] %v1360
    %1408 = vst [vmem:[%s1398 + $0x48] sm:$0xff] %v1365
    %1409 = vst [vmem:[%s1398 + $0x50] sm:$0xff] %v1370
    %1410 = vst [vmem:[%s1398 + $0x58] sm:$0xff] %v1375
    %1411 = vst [vmem:[%s1398 + $0x60] sm:$0xff] %v1380
    %1412 = vst [vmem:[%s1398 + $0x68] sm:$0xff] %v1385
    %1413 = vst [vmem:[%s1398 + $0x70] sm:$0xff] %v1390
    %1414 = vst [vmem:[%s1398 + $0x78] sm:$0xff] %v1395
  $region14: #{ilnet_forward.1} parent=0 // loop_footer
    %s16 = sadd.s32 1, %s12
  $region15: #{ilnet_forward.1} parent=0 // loop_footer_branch
    %11 = sbr.rel target = $region11
  $region16: #{ilnet_forward.1} parent=0 // loop_exit
    _
  // Predicated region
  $region17: #{ilnet_forward.1} parent=0 // pred_check
    _
  $region18: #{ilnet_forward.1} parent=0 // pred_check_branch
    %1416 = sbr.rel (0) target = $region20
  $region19: #{ilnet_forward.1} parent=0 // pred_region
    _
  $region20: #{ilnet_forward.1} parent=0 // pred_fallthru
    _
  // Predicated region
  $region21: #{ilnet_forward.1} parent=0 // pred_check
    _
  $region22: #{ilnet_forward.1} parent=0 // pred_check_branch
    %1418 = sbr.rel (0) target = $region24
  $region23: #{ilnet_forward.1} parent=0 // pred_region
    _
  $region24: #{ilnet_forward.1} parent=0 // pred_fallthru
    _

</llo_original>
